<compile_context>
chip_gen: v6e
topology: v6e:2x2x1
jax: 0.10.0
libtpu: 0.0.40
codegen_flags: <defaults>
</compile_context>

<pallas_src>
import functools

import jax
import jax.numpy as jnp
from jax.experimental import pallas as pl
from jax.experimental.pallas import tpu as pltpu


def _deep_asymmetric_kernel(xT_ref, w1T_ref, b1_ref, w2_ref, b2_ref,
                            t_ref, e_ref, est_ref, part_ref,
                            *, rem, inv_sigma):
    # ---- layer 1 on the MXU, lane-major: (H, D) @ (D, TN) -> (H, TN) ----
    h = jnp.dot(w1T_ref[...], xT_ref[...], preferred_element_type=jnp.float32)
    h = jnp.maximum(h + b1_ref[...], 0.0)                 # bias (H,1) lane-broadcast

    # ---- layer 2: output width 1 -> VPU broadcast-multiply against w2 (H,1)
    # plus a sublane (XLU) reduction; no dead 1-wide MXU pass ----
    y = jnp.sum(h * w2_ref[...], axis=0, keepdims=True) + b2_ref[...]   # (1, TN)

    est_ref[...] = y.astype(est_ref.dtype)                # lane-dense store

    # ---- SurvivalPointLoss (asymmetric pointwise, measure='mse'), f32 ----
    t = t_ref[...]                                        # (1, TN)
    e = e_ref[...]                                        # (1, TN)
    diff = y - t
    # numerically-stable sigmoid via tanh (EUP); avoids exp overflow at sigma=0.01
    z = (t - y) * inv_sigma
    sig = 0.5 * (jnp.tanh(0.5 * z) + 1.0)
    gate = e + (1.0 - e) * sig
    per = gate * diff * diff                              # measure='mse'

    # per-tile partial sum, written to this step's own lane-dense (1,128) block
    # (disjoint across grid steps -> grid axis can be "parallel" for v7x).
    part_ref[...] = jnp.full(part_ref.shape, jnp.sum(per), jnp.float32)

    if rem:
        # Only the LAST tile contains padded rows; only it pays for the mask.
        @pl.when(pl.program_id(0) == pl.num_programs(0) - 1)
        def _():
            col = jax.lax.broadcasted_iota(jnp.int32, per.shape, 1)
            masked = jnp.where(col < rem, per, 0.0)
            part_ref[...] = jnp.full(part_ref.shape, jnp.sum(masked), jnp.float32)


def deep_asymmetric_forward(params, x, event_time, event_indicator,
                            sigma=0.01, block_n=32768, matmul_dtype=jnp.bfloat16):
    """Returns (loss, estimate, loss, loss) exactly like DeepAsymmetric.forward.

    matmul_dtype=jnp.bfloat16 (default) halves HBM traffic for the streamed x
    copy and is MXU-native on v5e/v6e/v7x; pass jnp.float32 for exact PyTorch
    f32 parity. Elementwise loss math is always f32.
    block_n: batch tile (lanes). Sweep 16384/32768/65536 per chip; it is
    clipped to the padded batch and rounded to a multiple of 128.
    """
    N, D = x.shape
    H = params["w1"].shape[1]

    # Lane-aligned batch tile: large enough that per-step DMA time dominates the
    # ~0.35 us fixed grid-step overhead; still a small fraction of the 48 MiB
    # VMEM budget even double-buffered (xT tile bf16 @ 32768 lanes = 1 MiB).
    tn = max(128, min(block_n, pl.cdiv(N, 128) * 128))
    tn = (tn // 128) * 128
    g = pl.cdiv(N, tn)
    n_pad = g * tn
    rem = N % tn

    mm_dtype = jnp.float32 if matmul_dtype is None else matmul_dtype

    # Layout plumbing (single fused cast+transpose+pad pass): batch axis onto
    # the 128-lane axis. t/e are tiny (4 B/row) so padding them costs nothing.
    xT = jnp.pad(x.astype(mm_dtype).T, ((0, 0), (0, n_pad - N)))
    t_row = jnp.pad(event_time.astype(jnp.float32).reshape(1, N),
                    ((0, 0), (0, n_pad - N)))
    e_row = jnp.pad(event_indicator.astype(jnp.float32).reshape(1, N),
                    ((0, 0), (0, n_pad - N)))

    w1T = jnp.transpose(params["w1"]).astype(mm_dtype)        # (H, D)
    b1c = params["b1"].reshape(H, 1).astype(jnp.float32)      # (H, 1)
    w2c = params["w2"].reshape(H, 1).astype(jnp.float32)      # (H, 1)
    b2c = params["b2"].reshape(1, 1).astype(jnp.float32)      # (1, 1)

    kernel = functools.partial(_deep_asymmetric_kernel,
                               rem=rem,
                               inv_sigma=1.0 / float(sigma))

    est, partials = pl.pallas_call(
        kernel,
        out_shape=(
            jax.ShapeDtypeStruct((1, n_pad), jnp.float32),    # estimate, lane-dense
            jax.ShapeDtypeStruct((1, g * 128), jnp.float32),  # per-tile partial sums
        ),
        grid_spec=pltpu.PrefetchScalarGridSpec(
            num_scalar_prefetch=0,
            grid=(g,),
            in_specs=[
                pl.BlockSpec((D, tn), lambda i: (0, i)),      # x^T   streamed
                pl.BlockSpec((H, D), lambda i: (0, 0)),       # W1^T  resident
                pl.BlockSpec((H, 1), lambda i: (0, 0)),       # b1    resident
                pl.BlockSpec((H, 1), lambda i: (0, 0)),       # w2    resident
                pl.BlockSpec((1, 1), lambda i: (0, 0)),       # b2    resident
                pl.BlockSpec((1, tn), lambda i: (0, i)),      # event_time
                pl.BlockSpec((1, tn), lambda i: (0, i)),      # event_indicator
            ],
            out_specs=(
                pl.BlockSpec((1, tn), lambda i: (0, i)),      # estimate
                pl.BlockSpec((1, 128), lambda i: (0, i)),     # loss partials
            ),
        ),
        compiler_params=pltpu.CompilerParams(
            # All outputs are per-step disjoint, so the batch axis is fully
            # parallel -> v7x megacore can shard it across its 2 TensorCores.
            dimension_semantics=("parallel",),
            # 48 MiB: below v7x's 64 MiB physical VMEM, trivially safe on the
            # 128 MiB v5e/v6e parts, and ample for tn up to 65536 with
            # double-buffered streams plus the (H, tn) f32 hidden intermediate.
            vmem_limit_bytes=48 * 1024 * 1024,
        ),
    )(xT, w1T, b1c, w2c, b2c, t_row, e_row)

    estimate = est.reshape(-1)[:N]                            # estimate.view(-1)
    # finish the mean in the wrapper (one f32 value per tile -> exact & parallel-safe)
    loss_s = jnp.sum(partials.reshape(g, 128)[:, 0]) / jnp.float32(N)
    return (loss_s, estimate, loss_s, loss_s)


if __name__ == "__main__":
    N, D, H = 8, 16, 32

    key = jax.random.PRNGKey(0)
    kx, kt, ke, k1, k2 = jax.random.split(key, 5)

    x = jax.random.normal(kx, (N, D), jnp.float32)
    event_time = jax.random.uniform(kt, (N,), jnp.float32, minval=0.5, maxval=5.0)
    event_indicator = (jax.random.uniform(ke, (N,)) > 0.5).astype(jnp.float32)

    # deterministic parameter init (shapes implied by the MLP above)
    params = {
        "w1": jax.random.normal(k1, (D, H), jnp.float32) * (1.0 / jnp.sqrt(D)),
        "b1": jnp.zeros((1, H), jnp.float32),
        "w2": jax.random.normal(k2, (H, 1), jnp.float32) * (1.0 / jnp.sqrt(H)),
        "b2": jnp.zeros((1, 1), jnp.float32),
    }

    loss, estimate, loss2, loss3 = deep_asymmetric_forward(
        params, x, event_time, event_indicator, sigma=0.01)
    jax.block_until_ready((loss, estimate, loss2, loss3))

    assert estimate.shape == (N,)
    assert loss.shape == ()
    assert bool(jnp.isfinite(loss))
    print("KERNEL_OK")
</pallas_src>

<mosaic_0001>
module attributes {stable_mosaic.version = 11 : i64} {
  func.func @_deep_asymmetric_kernel(%arg0: i32, %arg1: memref<16x128xbf16, #tpu.memory_space<vmem>>, %arg2: memref<32x16xbf16, #tpu.memory_space<vmem>>, %arg3: memref<32x1xf32, #tpu.memory_space<vmem>>, %arg4: memref<32x1xf32, #tpu.memory_space<vmem>>, %arg5: memref<1x1xf32, #tpu.memory_space<vmem>>, %arg6: memref<1x128xf32, #tpu.memory_space<vmem>>, %arg7: memref<1x128xf32, #tpu.memory_space<vmem>>, %arg8: memref<1x128xf32, #tpu.memory_space<vmem>>, %arg9: memref<1x128xf32, #tpu.memory_space<vmem>>) attributes {dimension_semantics = [#tpu.dimension_semantics<parallel>], iteration_bounds = array<i64: 1>, scalar_prefetch = 0 : i64, scratch_operands = 0 : i64, tpu.core_type = #tpu.core_type<tc>, window_params = [{transform_indices = @transform_0, window_bounds = array<i64: 16, 128>}, {pipeline_mode = #tpu.pipeline_mode<synchronous>, transform_indices = @transform_1, window_bounds = array<i64: 32, 16>}, {pipeline_mode = #tpu.pipeline_mode<synchronous>, transform_indices = @transform_2, window_bounds = array<i64: 32, 1>}, {pipeline_mode = #tpu.pipeline_mode<synchronous>, transform_indices = @transform_3, window_bounds = array<i64: 32, 1>}, {pipeline_mode = #tpu.pipeline_mode<synchronous>, transform_indices = @transform_4, window_bounds = array<i64: 1, 1>}, {transform_indices = @transform_5, window_bounds = array<i64: 1, 128>}, {transform_indices = @transform_6, window_bounds = array<i64: 1, 128>}, {transform_indices = @transform_7, window_bounds = array<i64: 1, 128>}, {transform_indices = @transform_8, window_bounds = array<i64: 1, 128>}]} {
    %c0 = arith.constant 0 : index
    %c0_0 = arith.constant 0 : index
    %0 = vector.load %arg2[%c0, %c0_0] : memref<32x16xbf16, #tpu.memory_space<vmem>>, vector<32x16xbf16>
    %c0_1 = arith.constant 0 : index
    %c0_2 = arith.constant 0 : index
    %1 = vector.load %arg1[%c0_1, %c0_2] : memref<16x128xbf16, #tpu.memory_space<vmem>>, vector<16x128xbf16>
    %cst = arith.constant dense<0.000000e+00> : vector<32x128xf32>
    %2 = tpu.matmul %0, %1, %cst {dimension_numbers = #tpu.dot_dimension_numbers<[1], [0], [0], [1], [0, 0, 1, 1], [], []>} : vector<32x16xbf16>, vector<16x128xbf16>, vector<32x128xf32> -> vector<32x128xf32>
    %c0_3 = arith.constant 0 : index
    %c0_4 = arith.constant 0 : index
    %3 = vector.load %arg3[%c0_3, %c0_4] : memref<32x1xf32, #tpu.memory_space<vmem>>, vector<32x1xf32>
    %4 = vector.broadcast %3 : vector<32x1xf32> to vector<32x128xf32>
    %5 = arith.addf %2, %4 : vector<32x128xf32>
    %cst_5 = arith.constant 0.000000e+00 : f32
    %6 = vector.broadcast %cst_5 : f32 to vector<32x128xf32>
    %7 = arith.maximumf %5, %6 : vector<32x128xf32>
    %c0_6 = arith.constant 0 : index
    %c0_7 = arith.constant 0 : index
    %8 = vector.load %arg4[%c0_6, %c0_7] : memref<32x1xf32, #tpu.memory_space<vmem>>, vector<32x1xf32>
    %9 = vector.broadcast %8 : vector<32x1xf32> to vector<32x128xf32>
    %10 = arith.mulf %7, %9 : vector<32x128xf32>
    %cst_8 = arith.constant dense<0.000000e+00> : vector<128xf32>
    %11 = vector.multi_reduction <add>, %10, %cst_8 [0] : vector<32x128xf32> to vector<128xf32>
    %12 = vector.shape_cast %11 : vector<128xf32> to vector<1x128xf32>
    %c0_9 = arith.constant 0 : index
    %c0_10 = arith.constant 0 : index
    %13 = vector.load %arg5[%c0_9, %c0_10] : memref<1x1xf32, #tpu.memory_space<vmem>>, vector<1x1xf32>
    %14 = vector.broadcast %13 : vector<1x1xf32> to vector<1x128xf32>
    %15 = arith.addf %12, %14 : vector<1x128xf32>
    %c0_11 = arith.constant 0 : index
    %c0_12 = arith.constant 0 : index
    %16 = vector.load %arg8[%c0_11, %c0_12] : memref<1x128xf32, #tpu.memory_space<vmem>>, vector<1x128xf32>
    tpu.vector_store %arg8[%c0_11, %c0_12], %15 {strides = array<i32>} : memref<1x128xf32, #tpu.memory_space<vmem>>, vector<1x128xf32>,
    %c0_13 = arith.constant 0 : index
    %c0_14 = arith.constant 0 : index
    %17 = vector.load %arg6[%c0_13, %c0_14] : memref<1x128xf32, #tpu.memory_space<vmem>>, vector<1x128xf32>
    %c0_15 = arith.constant 0 : index
    %c0_16 = arith.constant 0 : index
    %18 = vector.load %arg7[%c0_15, %c0_16] : memref<1x128xf32, #tpu.memory_space<vmem>>, vector<1x128xf32>
    %19 = arith.subf %15, %17 : vector<1x128xf32>
    %20 = arith.subf %17, %15 : vector<1x128xf32>
    %cst_17 = arith.constant 1.000000e+02 : f32
    %21 = vector.broadcast %cst_17 : f32 to vector<1x128xf32>
    %22 = arith.mulf %20, %21 : vector<1x128xf32>
    %cst_18 = arith.constant 5.000000e-01 : f32
    %23 = vector.broadcast %cst_18 : f32 to vector<1x128xf32>
    %24 = arith.mulf %23, %22 : vector<1x128xf32>
    %25 = math.tanh %24 : vector<1x128xf32>
    %cst_19 = arith.constant 1.000000e+00 : f32
    %26 = vector.broadcast %cst_19 : f32 to vector<1x128xf32>
    %27 = arith.addf %25, %26 : vector<1x128xf32>
    %cst_20 = arith.constant 5.000000e-01 : f32
    %28 = vector.broadcast %cst_20 : f32 to vector<1x128xf32>
    %29 = arith.mulf %28, %27 : vector<1x128xf32>
    %cst_21 = arith.constant 1.000000e+00 : f32
    %30 = vector.broadcast %cst_21 : f32 to vector<1x128xf32>
    %31 = arith.subf %30, %18 : vector<1x128xf32>
    %32 = arith.mulf %31, %29 : vector<1x128xf32>
    %33 = arith.addf %18, %32 : vector<1x128xf32>
    %34 = arith.mulf %33, %19 : vector<1x128xf32>
    %35 = arith.mulf %34, %19 : vector<1x128xf32>
    %36 = vector.shape_cast %35 : vector<1x128xf32> to vector<1x1x128xf32>
    %cst_22 = arith.constant dense<0.000000e+00> : vector<1xf32>
    %37 = vector.multi_reduction <add>, %36, %cst_22 [1, 2] : vector<1x1x128xf32> to vector<1xf32>
    %38 = vector.shape_cast %37 : vector<1xf32> to vector<1x1x1xf32>
    %39 = vector.extract %38[0, 0, 0] : f32 from vector<1x1x1xf32>
    %40 = vector.broadcast %39 : f32 to vector<1x128xf32>
    %c0_23 = arith.constant 0 : index
    %c0_24 = arith.constant 0 : index
    %41 = vector.load %arg9[%c0_23, %c0_24] : memref<1x128xf32, #tpu.memory_space<vmem>>, vector<1x128xf32>
    tpu.vector_store %arg9[%c0_23, %c0_24], %40 {strides = array<i32>} : memref<1x128xf32, #tpu.memory_space<vmem>>, vector<1x128xf32>,
    %c0_i32 = arith.constant 0 : i32
    %42 = arith.cmpi eq, %arg0, %c0_i32 : i32
    %43 = arith.extui %42 : i1 to i32
    %c0_i32_25 = arith.constant 0 : i32
    %44 = arith.cmpi ne, %43, %c0_i32_25 : i32
    scf.if %44 {
      %45 = tpu.iota {dimensions = array<i32: 1>} : vector<1x128xi32>
      %c8_i32 = arith.constant 8 : i32
      %46 = vector.broadcast %c8_i32 : i32 to vector<1x128xi32>
      %47 = arith.cmpi slt, %45, %46 : vector<1x128xi32>
      %cst_26 = arith.constant 0.000000e+00 : f32
      %48 = vector.broadcast %cst_26 : f32 to vector<1x128xf32>
      %49 = arith.select %47, %35, %48 : vector<1x128xi1>, vector<1x128xf32>
      %50 = vector.shape_cast %49 : vector<1x128xf32> to vector<1x1x128xf32>
      %cst_27 = arith.constant dense<0.000000e+00> : vector<1xf32>
      %51 = vector.multi_reduction <add>, %50, %cst_27 [1, 2] : vector<1x1x128xf32> to vector<1xf32>
      %52 = vector.shape_cast %51 : vector<1xf32> to vector<1x1x1xf32>
      %53 = vector.extract %52[0, 0, 0] : f32 from vector<1x1x1xf32>
      %54 = vector.broadcast %53 : f32 to vector<1x128xf32>
      %c0_28 = arith.constant 0 : index
      %c0_29 = arith.constant 0 : index
      %55 = vector.load %arg9[%c0_28, %c0_29] : memref<1x128xf32, #tpu.memory_space<vmem>>, vector<1x128xf32>
      tpu.vector_store %arg9[%c0_28, %c0_29], %54 {strides = array<i32>} : memref<1x128xf32, #tpu.memory_space<vmem>>, vector<1x128xf32>,
    } else {
    }
    return
  }
  func.func @transform_0(%arg0: i32) -> (i32, i32) {
    %c0_i32 = arith.constant 0 : i32
    %c0_i32_0 = arith.constant 0 : i32
    return %c0_i32, %arg0 : i32, i32
  }
  func.func @transform_1(%arg0: i32) -> (i32, i32) {
    %c0_i32 = arith.constant 0 : i32
    %c0_i32_0 = arith.constant 0 : i32
    %c0_i32_1 = arith.constant 0 : i32
    return %c0_i32, %c0_i32_0 : i32, i32
  }
  func.func @transform_2(%arg0: i32) -> (i32, i32) {
    %c0_i32 = arith.constant 0 : i32
    %c0_i32_0 = arith.constant 0 : i32
    %c0_i32_1 = arith.constant 0 : i32
    return %c0_i32, %c0_i32_0 : i32, i32
  }
  func.func @transform_3(%arg0: i32) -> (i32, i32) {
    %c0_i32 = arith.constant 0 : i32
    %c0_i32_0 = arith.constant 0 : i32
    %c0_i32_1 = arith.constant 0 : i32
    return %c0_i32, %c0_i32_0 : i32, i32
  }
  func.func @transform_4(%arg0: i32) -> (i32, i32) {
    %c0_i32 = arith.constant 0 : i32
    %c0_i32_0 = arith.constant 0 : i32
    %c0_i32_1 = arith.constant 0 : i32
    return %c0_i32, %c0_i32_0 : i32, i32
  }
  func.func @transform_5(%arg0: i32) -> (i32, i32) {
    %c0_i32 = arith.constant 0 : i32
    %c0_i32_0 = arith.constant 0 : i32
    return %c0_i32, %arg0 : i32, i32
  }
  func.func @transform_6(%arg0: i32) -> (i32, i32) {
    %c0_i32 = arith.constant 0 : i32
    %c0_i32_0 = arith.constant 0 : i32
    return %c0_i32, %arg0 : i32, i32
  }
  func.func @transform_7(%arg0: i32) -> (i32, i32) {
    %c0_i32 = arith.constant 0 : i32
    %c0_i32_0 = arith.constant 0 : i32
    return %c0_i32, %arg0 : i32, i32
  }
  func.func @transform_8(%arg0: i32) -> (i32, i32) {
    %c0_i32 = arith.constant 0 : i32
    %c0_i32_0 = arith.constant 0 : i32
    return %c0_i32, %arg0 : i32, i32
  }
}

</mosaic_0001>

<llo_original>
// kernel: tpu_custom_call.1
$region0: #{tpu_custom_call.1}
  #allocation0 [shape = 'u32[]', space=smem, size = 0x4, offset = 0x4, fixed_abs, tag = 'smem constant byte address 0x4 - core index']
  #allocation1 [shape = 'u32[144,128]{1,0:T(1,128)}', space=vmem, size = 0x12000, scoped, tag = 'internal scratch']
  #allocation2 [shape = 'f32[1,1]{1,0:T(1,128)S(1)}', space=vmem, size = 0x200, scoped, tag = 'scoped memory for tpu_custom_call.1']
  %s0 = inlined_call_operand.vmem [shape: bf16[16,128], index: 0, kind: input, shape index: {}]
  %s1 = inlined_call_operand.vmem [shape: bf16[32,16], index: 1, kind: input, shape index: {}]
  %s2 = inlined_call_operand.vmem [shape: f32[32,1], index: 2, kind: input, shape index: {}]
  %s3 = inlined_call_operand.vmem [shape: f32[32,1], index: 3, kind: input, shape index: {}]
  %s4 = inlined_call_operand.<no memory space> [shape: f32[1,1], index: 4, kind: input, shape index: {}]
  %s5 = inlined_call_operand.vmem [shape: f32[1,128], index: 5, kind: input, shape index: {}]
  %s6 = inlined_call_operand.vmem [shape: f32[1,128], index: 6, kind: input, shape index: {}]
  %s7 = inlined_call_operand.hbm [shape: f32[1,128], index: 7, kind: output, shape index: {0}]
  %s8 = inlined_call_operand.hbm [shape: f32[1,128], index: 8, kind: output, shape index: {1}]
  %9 = xla_tuple %s7, %s8
  %s10 = sld [smem:[#allocation0]]
  $region50: #{tpu_custom_call.1} parent=0
    _
  %s12 = ssub.s32 1, %s10
  %s13 = scalar_select 0, %s12, %s10
  %v14 = vstv %s4
  %15 = vst [vmem:[#allocation2] sm:$0x1] %v14
  $region1: #{tpu_custom_call.1} parent=0
    #allocation3 [shape = 'u8[512]{0}', space=vmem, size = 0x400, scoped, tag = 'output window, operand 0, single buffered']
    #allocation4 [shape = 's32[1]{0}', space=sflag, size = 0x4, scoped, tag = 'scoped memory for tpu_custom_call.1']
    #allocation5 [shape = 'u8[512]{0}', space=vmem, size = 0x400, scoped, tag = 'output window, operand 1, single buffered']
    #allocation6 [shape = 's32[1]{0}', space=sflag, size = 0x4, scoped, tag = 'scoped memory for tpu_custom_call.1']
    %16 = vsyncpa [#allocation4], 0
    %17 = vsyncpa [#allocation6], 0
    // Predicated region
    $region2: #{tpu_custom_call.1} parent=1 // pred_check
      _
    $region3: #{tpu_custom_call.1} parent=1 // pred_check_branch
      %19 = sbr.rel (0) target = $region5
    $region4: #{tpu_custom_call.1} parent=1 // pred_region
      _
    $region5: #{tpu_custom_call.1} parent=1 // pred_fallthru
      _
    // Predicated region
    $region6: #{tpu_custom_call.1} parent=1 // pred_check
      _
    $region7: #{tpu_custom_call.1} parent=1 // pred_check_branch
      %21 = sbr.rel (0) target = $region9
    $region8: #{tpu_custom_call.1} parent=1 // pred_region
      _
    $region9: #{tpu_custom_call.1} parent=1 // pred_fallthru
      _
    // Predicated region
    $region10: #{tpu_custom_call.1} parent=1 // pred_check
      _
    $region11: #{tpu_custom_call.1} parent=1 // pred_check_branch
      %23 = sbr.rel (0) target = $region13
    $region12: #{tpu_custom_call.1} parent=1 // pred_region
      _
    $region13: #{tpu_custom_call.1} parent=1 // pred_fallthru
      _
    // Predicated region
    $region14: #{tpu_custom_call.1} parent=1 // pred_check
      _
    $region15: #{tpu_custom_call.1} parent=1 // pred_check_branch
      %25 = sbr.rel (0) target = $region17
    $region16: #{tpu_custom_call.1} parent=1 // pred_region
      _
    $region17: #{tpu_custom_call.1} parent=1 // pred_fallthru
      _
    // Predicated region
    $region18: #{tpu_custom_call.1} parent=1 // pred_check
      _
    $region19: #{tpu_custom_call.1} parent=1 // pred_check_branch
      %27 = sbr.rel (0) target = $region21
    $region20: #{tpu_custom_call.1} parent=1 // pred_region
      _
    $region21: #{tpu_custom_call.1} parent=1 // pred_fallthru
      _
    // Predicated region
    $region22: #{tpu_custom_call.1} parent=1 // pred_check
      _
    $region23: #{tpu_custom_call.1} parent=1 // pred_check_branch
      %29 = sbr.rel (0) target = $region25
    $region24: #{tpu_custom_call.1} parent=1 // pred_region
      _
    $region25: #{tpu_custom_call.1} parent=1 // pred_fallthru
      _
    // Predicated region
    $region26: #{tpu_custom_call.1} parent=1 // pred_check
      _
    $region27: #{tpu_custom_call.1} parent=1 // pred_check_branch
      %31 = sbr.rel (0) target = $region29
    $region28: #{tpu_custom_call.1} parent=1 // pred_region
      _
    $region29: #{tpu_custom_call.1} parent=1 // pred_fallthru
      _
    %v33 = vld [vmem:[%s1] sm:$0xf]
    %v34 = vld [vmem:[%s1 + $0x4] sm:$0xf]
    %v35 = vld [vmem:[%s1 + $0x8] sm:$0xf]
    %v36 = vld [vmem:[%s1 + $0xc] sm:$0xf]
    %v37 = vld [vmem:[%s0] sm:$0xf]
    %v38 = vld [vmem:[%s0 + $0x4] sm:$0xf]
    %v39 = vld [vmem:[%s2] sm:$0xff]
    %v40 = vld [vmem:[%s2 + $0x8] sm:$0xff]
    %v41 = vld [vmem:[%s2 + $0x10] sm:$0xff]
    %v42 = vld [vmem:[%s2 + $0x18] sm:$0xff]
    %44 = vset.pattern.permute.xlu0 0
    %45 = vperm.xlu0 %44, %v39
    %v46 = vpop.permute.xlu0 %45
    %49 = vset.pattern.permute.xlu0 0
    %50 = vperm.xlu0 %49, %v40
    %v51 = vpop.permute.xlu0 %50
    %54 = vset.pattern.permute.xlu0 0
    %55 = vperm.xlu0 %54, %v41
    %v56 = vpop.permute.xlu0 %55
    %59 = vset.pattern.permute.xlu0 0
    %60 = vperm.xlu0 %59, %v42
    %v61 = vpop.permute.xlu0 %60
    %v67 = vunpack.c.l.b16 %v33
    %v68 = vunpack.c.l.b16 %v34
    %v69 = vunpack.c.l.b16 %v35
    %v70 = vunpack.c.l.b16 %v36
    %v71 = vpack.c.b16 %v68, %v67
    %v72 = vpack.c.b16 %v70, %v69
    %v75 = vunpack.c.l.b16 %v37
    %v76 = vunpack.c.l.b16 %v38
    %v77 = vpack.c.b16 %v76, %v75
    %vm79 = vcmask 130048
    %v81 = vsel %vm79, %v71, 0
    %v84 = vsel %vm79, %v72, 0
    %86 = vmatprep.subr.bf16.mxu0 0
    %87 = vmatpush1.bf16.msra.mxu0 0
    %88 = vmatprep.subr.bf16.mxu0 0
    %89 = vmatpush1.bf16.msra.mxu0 0
    %90 = vmatprep.subr.bf16.mxu0 0
    %91 = vmatpush1.bf16.msra.mxu0 0
    %92 = vmatprep.subr.bf16.mxu0 0
    %93 = vmatpush1.bf16.msra.mxu0 0
    %94 = vmatprep.subr.bf16.mxu0 0
    %95 = vmatpush1.bf16.msra.mxu0 0
    %96 = vmatprep.subr.bf16.mxu0 0
    %97 = vmatpush1.bf16.msra.mxu0 0
    %98 = vmatprep.subr.bf16.mxu0 0
    %99 = vmatpush1.bf16.msra.mxu0 0
    %100 = vmatprep.subr.bf16.mxu0 0
    %101 = vmatpush1.bf16.msra.mxu0 %v77
    %102 = vmatprep.subr.bf16.mxu0 0
    %103 = vmatpush2.bf16.msra.mxu0 0
    %104 = vmatprep.subr.bf16.mxu0 0
    %105 = vmatpush2.bf16.msra.mxu0 0
    %106 = vmatprep.subr.bf16.mxu0 0
    %107 = vmatpush2.bf16.msra.mxu0 0
    %108 = vmatprep.subr.bf16.mxu0 0
    %109 = vmatpush2.bf16.msra.mxu0 0
    %110 = vmatprep.subr.bf16.mxu0 0
    %111 = vmatpush2.bf16.msra.mxu0 0
    %112 = vmatprep.subr.bf16.mxu0 0
    %113 = vmatpush2.bf16.msra.mxu0 0
    %114 = vmatprep.subr.bf16.mxu0 0
    %115 = vmatpush2.bf16.msra.mxu0 0
    %116 = vmatprep.subr.bf16.mxu0 0
    %117 = vmatpush2.bf16.msra.mxu0 0
    %118 = vmatprep.mubr.bf16.mxu0 0
    %119 = vmatmul.mubr.bf16.gmra.mxu0 %v81
    %v120 = vpop.f32.mrf.mxu0
    %v121 = vadd.f32 %v46, %v120
    %v122 = vpop.f32.mrf.mxu0
    %v123 = vpop.f32.mrf.mxu0
    %v124 = vadd.f32 %v51, %v123
    %v125 = vpop.f32.mrf.mxu0
    %126 = vmatprep.mubr.bf16.mxu0 0
    %127 = vmatmul.mubr.bf16.gmra.mxu0 %v84
    %v128 = vpop.f32.mrf.mxu0
    %v129 = vadd.f32 %v56, %v128
    %v130 = vpop.f32.mrf.mxu0
    %v131 = vpop.f32.mrf.mxu0
    %v132 = vadd.f32 %v61, %v131
    %v133 = vpop.f32.mrf.mxu0
    %134 = vdwg.mxu0
    %v135 = vmax.f32 %v121, 0.0
    %v136 = vmax.f32 %v124, 0.0
    %v137 = vmax.f32 %v129, 0.0
    %v138 = vmax.f32 %v132, 0.0
    %v139 = vld [vmem:[%s3] sm:$0xff]
    %v140 = vld [vmem:[%s3 + $0x8] sm:$0xff]
    %v141 = vld [vmem:[%s3 + $0x10] sm:$0xff]
    %v142 = vld [vmem:[%s3 + $0x18] sm:$0xff]
    %144 = vset.pattern.permute.xlu0 0
    %145 = vperm.xlu0 %144, %v139
    %v146 = vpop.permute.xlu0 %145
    %149 = vset.pattern.permute.xlu0 0
    %150 = vperm.xlu0 %149, %v140
    %v151 = vpop.permute.xlu0 %150
    %154 = vset.pattern.permute.xlu0 0
    %155 = vperm.xlu0 %154, %v141
    %v156 = vpop.permute.xlu0 %155
    %159 = vset.pattern.permute.xlu0 0
    %160 = vperm.xlu0 %159, %v142
    %v161 = vpop.permute.xlu0 %160
    %v163 = vmul.f32 %v135, %v146
    %v164 = vmul.f32 %v136, %v151
    %v165 = vmul.f32 %v137, %v156
    %v166 = vmul.f32 %v138, %v161
    %v167 = vadd.f32 %v163, %v164
    %v168 = vadd.f32 %v167, %v165
    %v169 = vadd.f32 %v168, %v166
    %v170 = vrot.slane %v169, 4
    %v171 = vadd.f32 %v169, %v170
    %v172 = vrot.slane %v171, 2
    %v173 = vadd.f32 %v171, %v172
    %v174 = vrot.slane %v173, 1
    %v175 = vadd.f32 %v173, %v174
    %v176 = vld [vmem:[#allocation2] sm:$0x1]
    %178 = vset.pattern.permute.xlu0 0
    %179 = vperm.xlu0 %178, %v176
    %v180 = vpop.permute.xlu0 %179
    %v182 = vlaneseq
    %v183 = vshrl.u32 %v182, 7
    %v184 = vsub.s32 0, %v183
    %v185 = vrot.slane %v180, %v184
    %v186 = vadd.f32 %v175, %v185
    %187 = vst [vmem:[#allocation3] sm:$0x1] %v186
    %v188 = vld [vmem:[%s5] sm:$0x1]
    %v189 = vld [vmem:[%s6] sm:$0x1]
    %v190 = vsub.f32 %v186, %v188
    %v191 = vsub.f32 %v188, %v186
    %v192 = vmul.f32 %v191, 100.0
    %v193 = vmul.f32 %v192, 0.5
    %v194 = vtanh.pop %v193
    %v195 = vadd.f32 %v194, 1.0
    %v196 = vmul.f32 %v195, 0.5
    %v197 = vsub.f32 1.0, %v189
    %v198 = vmul.f32 %v197, %v196
    %v199 = vadd.f32 %v189, %v198
    %v200 = vmul.f32 %v199, %v190
    %v201 = vmul.f32 %v200, %v190
    %vm202 = vcmask 1040384
    %v203 = vsel %vm202, %v201, 0.0
    %204 = vadd.xlane.f32.xlu0 %v203
    %v205 = vpop.xlane.xlu0 %204
    %v206 = vrot.slane %v205, 4
    %v207 = vadd.f32 %v205, %v206
    %v208 = vrot.slane %v207, 2
    %v209 = vadd.f32 %v207, %v208
    %v210 = vrot.slane %v209, 1
    %v211 = vadd.f32 %v209, %v210
    %s212 = vtos %v211
    %v213 = vstv %s212
    %214 = vst [vmem:[#allocation5] sm:$0x1] %v213
    %p215 = scmp.eq.s32.totalorder 0, 0
    // Predicated region
    $region30: #{tpu_custom_call.1} parent=1 // pred_check
      %p216 = pneg %p215
    $region31: #{tpu_custom_call.1} parent=1 // pred_check_branch
      %218 = sbr.rel (%p216) target = $region33
    $region32: #{tpu_custom_call.1} parent=1 // pred_region
      %v219 = vlaneseq
      %v220 = vand.u32 %v219, 127
      %vm221 = vcmp.lt.s32.totalorder %v220, 8
      %v222 = vsel %vm221, %v201, 0.0
      %v223 = vsel %vm202, %v222, 0.0
      %224 = vadd.xlane.f32.xlu0 %v223
      %v225 = vpop.xlane.xlu0 %224
      %v226 = vrot.slane %v225, 4
      %v227 = vadd.f32 %v225, %v226
      %v228 = vrot.slane %v227, 2
      %v229 = vadd.f32 %v227, %v228
      %v230 = vrot.slane %v229, 1
      %v231 = vadd.f32 %v229, %v230
      %s232 = vtos %v231
      %v233 = vstv %s232
      %234 = vst [vmem:[#allocation5] sm:$0x1] %v233
    $region33: #{tpu_custom_call.1} parent=1 // pred_fallthru
      _
    // Predicated region
    $region34: #{tpu_custom_call.1} parent=1 // pred_check
      _
    $region35: #{tpu_custom_call.1} parent=1 // pred_check_branch
      %236 = sbr.rel (0) target = $region37
    $region36: #{tpu_custom_call.1} parent=1 // pred_region
      %s238 = ssub.s32 16, 16
      %239 = vsyncadd [#allocation4], %s238
      %s241 = sshll.u32 [#allocation3], 4
      %s242 = int_to_ptr.vmem [resolvable:$true] %s241
      %244 = dma.vmem_to_hbm [thread:$0]  %s242, 16, %s7, [#allocation4]
    $region37: #{tpu_custom_call.1} parent=1 // pred_fallthru
      _
    // Predicated region
    $region38: #{tpu_custom_call.1} parent=1 // pred_check
      _
    $region39: #{tpu_custom_call.1} parent=1 // pred_check_branch
      %246 = sbr.rel (0) target = $region41
    $region40: #{tpu_custom_call.1} parent=1 // pred_region
      %s248 = ssub.s32 16, 16
      %249 = vsyncadd [#allocation6], %s248
      %s251 = sshll.u32 [#allocation5], 4
      %s252 = int_to_ptr.vmem [resolvable:$true] %s251
      %254 = dma.vmem_to_hbm [thread:$0]  %s252, 16, %s8, [#allocation6]
    $region41: #{tpu_custom_call.1} parent=1 // pred_fallthru
      _
    // Predicated region
    $region42: #{tpu_custom_call.1} parent=1 // pred_check
      _
    $region43: #{tpu_custom_call.1} parent=1 // pred_check_branch
      %256 = sbr.rel (0) target = $region45
    $region44: #{tpu_custom_call.1} parent=1 // pred_region
      %257 = dma.done [#allocation4], 16
    $region45: #{tpu_custom_call.1} parent=1 // pred_fallthru
      _
    // Predicated region
    $region46: #{tpu_custom_call.1} parent=1 // pred_check
      _
    $region47: #{tpu_custom_call.1} parent=1 // pred_check_branch
      %259 = sbr.rel (0) target = $region49
    $region48: #{tpu_custom_call.1} parent=1 // pred_region
      %260 = dma.done [#allocation6], 16
    $region49: #{tpu_custom_call.1} parent=1 // pred_fallthru
      _
    %261 = vsyncpa [#allocation4], 1
    %262 = vsyncpa [#allocation6], 1

</llo_original>
